<compile_context>
chip_gen: v5e
topology: v5e:2x2
jax: 0.10.0
libtpu: 0.0.40
codegen_flags: <defaults>
</compile_context>

<pallas_src>
import math

import jax
import jax.numpy as jnp
from jax.experimental import pallas as pl
from jax.experimental.pallas import tpu as pltpu


def _round_up(x: int, m: int) -> int:
    return ((x + m - 1) // m) * m


# ----------------------------------------------------------------------------
# Kernels
# ----------------------------------------------------------------------------
def _support_kernel(x_ref, w_ref, s_ref):
    """support[row-block] = x[row-block] @ W  (computed exactly once)."""
    s_ref[...] = jnp.dot(
        x_ref[...], w_ref[...], preferred_element_type=jnp.float32
    ).astype(s_ref.dtype)


def _aggregate_bias_kernel(adj_ref, s_ref, b_ref, out_ref):
    """out[i-block] = sum_k adj[i-block, k-block] @ support[k-block] + bias."""
    k = pl.program_id(1)

    @pl.when(k == 0)
    def _init():
        out_ref[...] = jnp.zeros_like(out_ref)

    # Accumulate directly into the f32 output block (VMEM-resident across k).
    out_ref[...] += jnp.dot(
        adj_ref[...], s_ref[...], preferred_element_type=jnp.float32)

    @pl.when(k == pl.num_programs(1) - 1)
    def _bias():
        out_ref[...] += b_ref[...]


def _aggregate_kernel(adj_ref, s_ref, out_ref):
    """Same as above but without the bias epilogue (bias=None)."""
    k = pl.program_id(1)

    @pl.when(k == 0)
    def _init():
        out_ref[...] = jnp.zeros_like(out_ref)

    out_ref[...] += jnp.dot(
        adj_ref[...], s_ref[...], preferred_element_type=jnp.float32)


# ----------------------------------------------------------------------------
# Tiling / adj preparation helpers
# ----------------------------------------------------------------------------
def choose_tiles(n: int):
    """Default (tm, tk) for the adj aggregation grid."""
    if n <= 1024:
        # Whole reduction in one block; >=2 row blocks so both TensorCores on
        # a v7x megacore get work even on small graphs.
        tk = _round_up(max(n, 128), 128)
        tm = max(8, _round_up(-(-n // 2), 8))
    else:
        # Large streamed adj tiles: 1 MiB bf16 per adj DMA, well above the
        # ~0.35 us per-grid-step overhead, and VMEM-safe on v7x's 64 MiB.
        tm, tk = 512, 1024
    return tm, tk


def prepare_adj(adj, *, tm: int, tk: int, compute_dtype=jnp.bfloat16):
    """One-time pad + cast of adj (hoist out of the per-layer call path)."""
    n = adj.shape[0]
    n_row_pad = _round_up(n, tm)
    n_col_pad = _round_up(n, tk)
    return jnp.pad(adj, ((0, n_row_pad - n), (0, n_col_pad - n))).astype(compute_dtype)


# ----------------------------------------------------------------------------
# Forward wrapper
# ----------------------------------------------------------------------------
def graph_convolution(x, adj, weight, bias=None, *,
                      compute_dtype=jnp.bfloat16, tm=None, tk=None,
                      adj_is_prepared=False):
    """Fused GCN layer: adj @ (x @ weight) [+ bias].

    x      : [N, F_in]  float32
    adj    : [N, N] float32 dense adjacency, OR an already-prepared padded
             compute_dtype array from prepare_adj(...) (adj_is_prepared=True).
    weight : [F_in, F_out]
    bias   : [1, F_out] or None
    """
    n, f_in = x.shape
    f_out = weight.shape[1]
    assert weight.shape == (f_in, f_out)
    if bias is not None:
        assert bias.shape == (1, f_out)

    # --- lane-dense padded feature dims --------------------------------------
    f_in_pad = _round_up(f_in, 128)     # lane dim of x tile / MXU K
    f_out_pad = _round_up(f_out, 128)   # lane-dense output columns

    # --- tile selection (reduction axis last in the grid) --------------------
    tm_d, tk_d = choose_tiles(n)
    tm = tm_d if tm is None else tm
    tk = tk_d if tk is None else tk
    assert tm % 8 == 0, "row tile must be a multiple of 8 (sublane)"
    assert tk % 128 == 0, "reduction tile must be a multiple of 128 (lane)"

    n_row_pad = _round_up(n, tm)    # rows padded independently ...
    n_col_pad = _round_up(n, tk)    # ... from the reduction columns (no lcm)

    # --- adjacency (prepared once, reused across layers if caller wants) -----
    if adj_is_prepared:
        adj_p = adj
        assert adj_p.shape == (n_row_pad, n_col_pad), (
            "prepared adj shape does not match tiling; re-run prepare_adj")
        assert adj_p.dtype == jnp.dtype(compute_dtype)
    else:
        assert adj.shape == (n, n)
        adj_p = prepare_adj(adj, tm=tm, tk=tk, compute_dtype=compute_dtype)

    # --- zero-pad x / W (cheap: O(N*F_in) and O(F_in*F_out)) -----------------
    x_p = jnp.pad(x, ((0, n_col_pad - n), (0, f_in_pad - f_in))).astype(compute_dtype)
    w_p = jnp.pad(weight, ((0, f_in_pad - f_in), (0, f_out_pad - f_out))
                  ).astype(compute_dtype)

    itemsize = jnp.dtype(compute_dtype).itemsize

    # --- Stage 1: support = x @ W  (computed once, never per row block) ------
    ts = tk  # divides n_col_pad; (ts, f_in_pad) x-tile streamed once
    support = pl.pallas_call(
        _support_kernel,
        out_shape=jax.ShapeDtypeStruct((n_col_pad, f_out_pad), compute_dtype),
        grid_spec=pltpu.PrefetchScalarGridSpec(
            num_scalar_prefetch=0,
            grid=(n_col_pad // ts,),
            in_specs=[
                pl.BlockSpec((ts, f_in_pad), lambda i: (i, 0)),
                pl.BlockSpec((f_in_pad, f_out_pad), lambda i: (0, 0)),
            ],
            out_specs=pl.BlockSpec((ts, f_out_pad), lambda i: (i, 0)),
        ),
        compiler_params=pltpu.CompilerParams(
            dimension_semantics=("parallel",)),
        cost_estimate=pl.CostEstimate(
            flops=2 * n_col_pad * f_in_pad * f_out_pad,
            transcendentals=0,
            bytes_accessed=(n_col_pad * f_in_pad + f_in_pad * f_out_pad
                            + n_col_pad * f_out_pad) * itemsize),
    )(x_p, w_p)

    # --- Stage 2: out = adj @ support (+ bias) --------------------------------
    grid = (n_row_pad // tm, n_col_pad // tk)
    n_row_blocks = grid[0]
    cost2 = pl.CostEstimate(
        flops=2 * n_row_pad * n_col_pad * f_out_pad,
        transcendentals=0,
        bytes_accessed=(n_row_pad * n_col_pad                       # adj once
                        + n_row_blocks * n_col_pad * f_out_pad      # support restream
                        ) * itemsize
        + n_row_pad * f_out_pad * 4                                  # f32 out
        + f_out_pad * 4,                                             # bias
    )

    in_specs = [
        pl.BlockSpec((tm, tk), lambda i, k: (i, k)),          # adj (streamed)
        pl.BlockSpec((tk, f_out_pad), lambda i, k: (k, 0)),   # support block
    ]
    operands = [adj_p, support]
    if bias is not None:
        b_p = jnp.pad(bias.astype(jnp.float32), ((0, 0), (0, f_out_pad - f_out)))
        in_specs.append(pl.BlockSpec((1, f_out_pad), lambda i, k: (0, 0)))
        operands.append(b_p)
        kernel = _aggregate_bias_kernel
    else:
        kernel = _aggregate_kernel

    out_p = pl.pallas_call(
        kernel,
        out_shape=jax.ShapeDtypeStruct((n_row_pad, f_out_pad), jnp.float32),
        grid_spec=pltpu.PrefetchScalarGridSpec(
            num_scalar_prefetch=0,
            grid=grid,
            in_specs=in_specs,
            # output block depends only on i -> resident f32 accumulator
            out_specs=pl.BlockSpec((tm, f_out_pad), lambda i, k: (i, 0)),
        ),
        compiler_params=pltpu.CompilerParams(
            dimension_semantics=("parallel", "arbitrary")),
        cost_estimate=cost2,
    )(*operands)

    # Slice padded rows / lane-padding columns back off.
    return out_p[:n, :f_out]


if __name__ == "__main__":
    # Small shapes consistent with the module: N nodes, in_features -> out_features.
    N, in_features, out_features = 16, 32, 8

    key = jax.random.PRNGKey(0)
    k_x, k_adj, k_w = jax.random.split(key, 3)

    # reset_parameters: weight ~ U(-stdv, stdv), stdv = sqrt(6/(in+out)); bias = 0.
    stdv = math.sqrt(6.0 / (in_features + out_features))
    weight = jax.random.uniform(
        k_w, (in_features, out_features), dtype=jnp.float32,
        minval=-stdv, maxval=stdv)
    bias = jnp.zeros((1, out_features), dtype=jnp.float32)

    x = jax.random.normal(k_x, (N, in_features), dtype=jnp.float32)
    adj_raw = jax.random.uniform(k_adj, (N, N), dtype=jnp.float32)
    adj = adj_raw / jnp.sum(adj_raw, axis=1, keepdims=True)  # row-normalized

    ref = adj @ (x @ weight) + bias

    # 1) Exact f32 path (matches the PyTorch forward to f32 accuracy).
    out_f32 = jax.block_until_ready(
        graph_convolution(x, adj, weight, bias, compute_dtype=jnp.float32))
    assert out_f32.shape == (N, out_features)
    assert jnp.allclose(out_f32, ref, atol=1e-5, rtol=1e-5), "f32 mismatch"

    # 2) Default bf16-operand path (f32 accumulation) -> relaxed tolerance.
    #    Note: support is f32-accumulated then rounded to bf16 before the
    #    second matmul (documented double-rounding vs a native bf16 x@W).
    out_bf16 = jax.block_until_ready(graph_convolution(x, adj, weight, bias))
    assert jnp.allclose(out_bf16, ref, atol=2e-2, rtol=2e-2), "bf16 mismatch"

    # 3) Prepared-adjacency path: pad + bf16 cast of adj hoisted out of the
    #    per-layer call (reused across layers/epochs in a real GCN).
    tm0, tk0 = choose_tiles(N)
    adj_prep = prepare_adj(adj, tm=tm0, tk=tk0, compute_dtype=jnp.bfloat16)
    out_prep = jax.block_until_ready(
        graph_convolution(x, adj_prep, weight, bias, adj_is_prepared=True))
    assert jnp.allclose(out_prep, ref, atol=2e-2, rtol=2e-2), "prepared-adj mismatch"

    # 4) Multi-tile path: exercises the (parallel row, arbitrary reduction)
    #    grid, the resident output accumulator, non-trivial padding/slicing,
    #    a non-128-multiple f_out, and the bias=None kernel variant.
    N2, fi2, fo2 = 200, 48, 136
    k_x2, k_adj2, k_w2, k_b2 = jax.random.split(jax.random.PRNGKey(1), 4)
    x2 = jax.random.normal(k_x2, (N2, fi2), dtype=jnp.float32)
    adj2_raw = jax.random.uniform(k_adj2, (N2, N2), dtype=jnp.float32)
    adj2 = adj2_raw / jnp.sum(adj2_raw, axis=1, keepdims=True)
    w2 = jax.random.normal(k_w2, (fi2, fo2), dtype=jnp.float32) * 0.1
    b2 = jax.random.normal(k_b2, (1, fo2), dtype=jnp.float32) * 0.1

    ref2_nobias = adj2 @ (x2 @ w2)
    out2_nobias = jax.block_until_ready(
        graph_convolution(x2, adj2, w2, None, compute_dtype=jnp.float32,
                          tm=64, tk=128))
    assert out2_nobias.shape == (N2, fo2)
    assert jnp.allclose(out2_nobias, ref2_nobias, atol=1e-4, rtol=1e-4), \
        "tiled no-bias mismatch"

    out2_bias = jax.block_until_ready(
        graph_convolution(x2, adj2, w2, b2, compute_dtype=jnp.float32,
                          tm=64, tk=128))
    assert jnp.allclose(out2_bias, ref2_nobias + b2, atol=1e-4, rtol=1e-4), \
        "tiled bias mismatch"

    print("KERNEL_OK")
</pallas_src>

<mosaic_0001>
module attributes {stable_mosaic.version = 11 : i64} {
  func.func @_support_kernel(%arg0: i32, %arg1: memref<128x128xf32, #tpu.memory_space<vmem>>, %arg2: memref<128x128xf32, #tpu.memory_space<vmem>>, %arg3: memref<128x128xf32, #tpu.memory_space<vmem>>) attributes {dimension_semantics = [#tpu.dimension_semantics<parallel>], iteration_bounds = array<i64: 1>, scalar_prefetch = 0 : i64, scratch_operands = 0 : i64, tpu.core_type = #tpu.core_type<tc>, window_params = [{transform_indices = @transform_0, window_bounds = array<i64: 128, 128>}, {pipeline_mode = #tpu.pipeline_mode<synchronous>, transform_indices = @transform_1, window_bounds = array<i64: 128, 128>}, {transform_indices = @transform_2, window_bounds = array<i64: 128, 128>}]} {
    %c0 = arith.constant 0 : index
    %c0_0 = arith.constant 0 : index
    %0 = vector.load %arg1[%c0, %c0_0] : memref<128x128xf32, #tpu.memory_space<vmem>>, vector<128x128xf32>
    %c0_1 = arith.constant 0 : index
    %c0_2 = arith.constant 0 : index
    %1 = vector.load %arg2[%c0_1, %c0_2] : memref<128x128xf32, #tpu.memory_space<vmem>>, vector<128x128xf32>
    %cst = arith.constant dense<0.000000e+00> : vector<128x128xf32>
    %2 = tpu.matmul %0, %1, %cst {dimension_numbers = #tpu.dot_dimension_numbers<[1], [0], [0], [1], [0, 0, 1, 1], [], []>} : vector<128x128xf32>, vector<128x128xf32>, vector<128x128xf32> -> vector<128x128xf32>
    %c0_3 = arith.constant 0 : index
    %c0_4 = arith.constant 0 : index
    %3 = vector.load %arg3[%c0_3, %c0_4] : memref<128x128xf32, #tpu.memory_space<vmem>>, vector<128x128xf32>
    tpu.vector_store %arg3[%c0_3, %c0_4], %2 {strides = array<i32>} : memref<128x128xf32, #tpu.memory_space<vmem>>, vector<128x128xf32>,
    return
  }
  func.func @transform_0(%arg0: i32) -> (i32, i32) {
    %c0_i32 = arith.constant 0 : i32
    %c0_i32_0 = arith.constant 0 : i32
    return %arg0, %c0_i32 : i32, i32
  }
  func.func @transform_1(%arg0: i32) -> (i32, i32) {
    %c0_i32 = arith.constant 0 : i32
    %c0_i32_0 = arith.constant 0 : i32
    %c0_i32_1 = arith.constant 0 : i32
    return %c0_i32, %c0_i32_0 : i32, i32
  }
  func.func @transform_2(%arg0: i32) -> (i32, i32) {
    %c0_i32 = arith.constant 0 : i32
    %c0_i32_0 = arith.constant 0 : i32
    return %arg0, %c0_i32 : i32, i32
  }
}

</mosaic_0001>

<llo_original>
// kernel: tpu_custom_call.1
$region0: #{tpu_custom_call.1}
  #allocation0 [shape = 'u32[]', space=smem, size = 0x4, offset = 0x4, fixed_abs, tag = 'smem constant byte address 0x4 - core index']
  #allocation1 [shape = 'u32[72,128]{1,0:T(1,128)}', space=vmem, size = 0x9000, scoped, tag = 'internal scratch']
  %s0 = inlined_call_operand.hbm [shape: f32[128,128], index: 0, kind: input, shape index: {}]
  %s1 = inlined_call_operand.hbm [shape: f32[128,128], index: 1, kind: input, shape index: {}]
  %s2 = inlined_call_operand.hbm [shape: f32[128,128], index: 2, kind: output, shape index: {}]
  %s3 = sld [smem:[#allocation0]]
  $region26: #{tpu_custom_call.1} parent=0
    _
  %s5 = ssub.s32 1, %s3
  %s6 = scalar_select 0, %s5, %s3
  $region1: #{tpu_custom_call.1} parent=0
    #allocation2 [shape = 'u8[65536]{0}', space=vmem, size = 0x10000, scoped, tag = 'input window, operand 0, single buffered']
    #allocation3 [shape = 's32[1]{0}', space=sflag, size = 0x4, scoped, tag = 'scoped memory for tpu_custom_call.1']
    #allocation4 [shape = 's32[1]{0}', space=sflag, size = 0x4, scoped, tag = 'scoped memory for tpu_custom_call.1']
    #allocation5 [shape = 'u8[65536]{0}', space=vmem, size = 0x10000, scoped, tag = 'input window, operand 1, single buffered']
    #allocation6 [shape = 's32[1]{0}', space=sflag, size = 0x4, scoped, tag = 'scoped memory for tpu_custom_call.1']
    #allocation7 [shape = 'u8[65536]{0}', space=vmem, size = 0x10000, scoped, tag = 'output window, operand 0, single buffered']
    %7 = vsyncpa [#allocation3], 0
    %8 = vsyncpa [#allocation6], 0
    %9 = vsyncpa [#allocation4], 0
    // Predicated region
    $region2: #{tpu_custom_call.1} parent=1 // pred_check
      _
    $region3: #{tpu_custom_call.1} parent=1 // pred_check_branch
      %11 = sbr.rel (0) target = $region5
    $region4: #{tpu_custom_call.1} parent=1 // pred_region
      %13 = vsyncadd [#allocation3], 0
      %s14 = sshll.u32 %s0, 4
      %s15 = int_to_ptr.hbm [resolvable:$true] %s14
      %s16 = sshll.u32 [#allocation2], 4
      %s17 = int_to_ptr.vmem [resolvable:$true] %s16
      %22 = dma.hbm_to_vmem [thread:$0]  %s15, 2048, %s17, [#allocation3], 128, 128, 8
    $region5: #{tpu_custom_call.1} parent=1 // pred_fallthru
      _
    // Predicated region
    $region6: #{tpu_custom_call.1} parent=1 // pred_check
      _
    $region7: #{tpu_custom_call.1} parent=1 // pred_check_branch
      %24 = sbr.rel (0) target = $region9
    $region8: #{tpu_custom_call.1} parent=1 // pred_region
      %26 = vsyncadd [#allocation6], 0
      %s27 = sshll.u32 %s1, 4
      %s28 = int_to_ptr.hbm [resolvable:$true] %s27
      %s29 = sshll.u32 [#allocation5], 4
      %s30 = int_to_ptr.vmem [resolvable:$true] %s29
      %35 = dma.hbm_to_vmem [thread:$0]  %s28, 2048, %s30, [#allocation6], 128, 128, 8
    $region9: #{tpu_custom_call.1} parent=1 // pred_fallthru
      _
    // Predicated region
    $region10: #{tpu_custom_call.1} parent=1 // pred_check
      _
    $region11: #{tpu_custom_call.1} parent=1 // pred_check_branch
      %37 = sbr.rel (0) target = $region13
    $region12: #{tpu_custom_call.1} parent=1 // pred_region
      %39 = dma.done [#allocation3], 2048
    $region13: #{tpu_custom_call.1} parent=1 // pred_fallthru
      _
    // Predicated region
    $region14: #{tpu_custom_call.1} parent=1 // pred_check
      _
    $region15: #{tpu_custom_call.1} parent=1 // pred_check_branch
      %41 = sbr.rel (0) target = $region17
    $region16: #{tpu_custom_call.1} parent=1 // pred_region
      %43 = dma.done [#allocation6], 2048
    $region17: #{tpu_custom_call.1} parent=1 // pred_fallthru
      _
    %v44 = vld [vmem:[#allocation2] sm:$0xff]
    %v45 = vld [vmem:[#allocation2 + $0x8] sm:$0xff]
    %v46 = vld [vmem:[#allocation2 + $0x10] sm:$0xff]
    %v47 = vld [vmem:[#allocation2 + $0x18] sm:$0xff]
    %v48 = vld [vmem:[#allocation2 + $0x20] sm:$0xff]
    %v49 = vld [vmem:[#allocation2 + $0x28] sm:$0xff]
    %v50 = vld [vmem:[#allocation2 + $0x30] sm:$0xff]
    %v51 = vld [vmem:[#allocation2 + $0x38] sm:$0xff]
    %v52 = vld [vmem:[#allocation2 + $0x40] sm:$0xff]
    %v53 = vld [vmem:[#allocation2 + $0x48] sm:$0xff]
    %v54 = vld [vmem:[#allocation2 + $0x50] sm:$0xff]
    %v55 = vld [vmem:[#allocation2 + $0x58] sm:$0xff]
    %v56 = vld [vmem:[#allocation2 + $0x60] sm:$0xff]
    %v57 = vld [vmem:[#allocation2 + $0x68] sm:$0xff]
    %v58 = vld [vmem:[#allocation2 + $0x70] sm:$0xff]
    %v59 = vld [vmem:[#allocation2 + $0x78] sm:$0xff]
    %v60 = vld [vmem:[#allocation5] sm:$0xff]
    %v61 = vld [vmem:[#allocation5 + $0x8] sm:$0xff]
    %v62 = vld [vmem:[#allocation5 + $0x10] sm:$0xff]
    %v63 = vld [vmem:[#allocation5 + $0x18] sm:$0xff]
    %v64 = vld [vmem:[#allocation5 + $0x20] sm:$0xff]
    %v65 = vld [vmem:[#allocation5 + $0x28] sm:$0xff]
    %v66 = vld [vmem:[#allocation5 + $0x30] sm:$0xff]
    %v67 = vld [vmem:[#allocation5 + $0x38] sm:$0xff]
    %v68 = vld [vmem:[#allocation5 + $0x40] sm:$0xff]
    %v69 = vld [vmem:[#allocation5 + $0x48] sm:$0xff]
    %v70 = vld [vmem:[#allocation5 + $0x50] sm:$0xff]
    %v71 = vld [vmem:[#allocation5 + $0x58] sm:$0xff]
    %v72 = vld [vmem:[#allocation5 + $0x60] sm:$0xff]
    %v73 = vld [vmem:[#allocation5 + $0x68] sm:$0xff]
    %v74 = vld [vmem:[#allocation5 + $0x70] sm:$0xff]
    %v75 = vld [vmem:[#allocation5 + $0x78] sm:$0xff]
    %76 = vmatpush.msra.mxu0 %v75
    %77 = vmatpush.msra.mxu0 %v74
    %78 = vmatpush.msra.mxu0 %v73
    %79 = vmatpush.msra.mxu0 %v72
    %80 = vmatpush.msra.mxu0 %v71
    %81 = vmatpush.msra.mxu0 %v70
    %82 = vmatpush.msra.mxu0 %v69
    %83 = vmatpush.msra.mxu0 %v68
    %84 = vmatpush.msra.mxu0 %v67
    %85 = vmatpush.msra.mxu0 %v66
    %86 = vmatpush.msra.mxu0 %v65
    %87 = vmatpush.msra.mxu0 %v64
    %88 = vmatpush.msra.mxu0 %v63
    %89 = vmatpush.msra.mxu0 %v62
    %90 = vmatpush.msra.mxu0 %v61
    %91 = vmatpush.msra.mxu0 %v60
    %92 = vmatmul.f32.gmra.mxu0 %v44
    %v93 = vpop.f32.mrf.mxu0
    %v94 = vadd.f32 0.0, %v93
    %95 = vmatmul.f32.gmra.mxu0 %v45
    %v96 = vpop.f32.mrf.mxu0
    %v97 = vadd.f32 0.0, %v96
    %98 = vmatmul.f32.gmra.mxu0 %v46
    %v99 = vpop.f32.mrf.mxu0
    %v100 = vadd.f32 0.0, %v99
    %101 = vmatmul.f32.gmra.mxu0 %v47
    %v102 = vpop.f32.mrf.mxu0
    %v103 = vadd.f32 0.0, %v102
    %104 = vmatmul.f32.gmra.mxu0 %v48
    %v105 = vpop.f32.mrf.mxu0
    %v106 = vadd.f32 0.0, %v105
    %107 = vmatmul.f32.gmra.mxu0 %v49
    %v108 = vpop.f32.mrf.mxu0
    %v109 = vadd.f32 0.0, %v108
    %110 = vmatmul.f32.gmra.mxu0 %v50
    %v111 = vpop.f32.mrf.mxu0
    %v112 = vadd.f32 0.0, %v111
    %113 = vmatmul.f32.gmra.mxu0 %v51
    %v114 = vpop.f32.mrf.mxu0
    %v115 = vadd.f32 0.0, %v114
    %116 = vmatmul.f32.gmra.mxu0 %v52
    %v117 = vpop.f32.mrf.mxu0
    %v118 = vadd.f32 0.0, %v117
    %119 = vmatmul.f32.gmra.mxu0 %v53
    %v120 = vpop.f32.mrf.mxu0
    %v121 = vadd.f32 0.0, %v120
    %122 = vmatmul.f32.gmra.mxu0 %v54
    %v123 = vpop.f32.mrf.mxu0
    %v124 = vadd.f32 0.0, %v123
    %125 = vmatmul.f32.gmra.mxu0 %v55
    %v126 = vpop.f32.mrf.mxu0
    %v127 = vadd.f32 0.0, %v126
    %128 = vmatmul.f32.gmra.mxu0 %v56
    %v129 = vpop.f32.mrf.mxu0
    %v130 = vadd.f32 0.0, %v129
    %131 = vmatmul.f32.gmra.mxu0 %v57
    %v132 = vpop.f32.mrf.mxu0
    %v133 = vadd.f32 0.0, %v132
    %134 = vmatmul.f32.gmra.mxu0 %v58
    %v135 = vpop.f32.mrf.mxu0
    %v136 = vadd.f32 0.0, %v135
    %137 = vmatmul.f32.gmra.mxu0 %v59
    %v138 = vpop.f32.mrf.mxu0
    %v139 = vadd.f32 0.0, %v138
    %140 = vdwg.mxu0
    %141 = vst [vmem:[#allocation7] sm:$0xff] %v94
    %142 = vst [vmem:[#allocation7 + $0x8] sm:$0xff] %v97
    %143 = vst [vmem:[#allocation7 + $0x10] sm:$0xff] %v100
    %144 = vst [vmem:[#allocation7 + $0x18] sm:$0xff] %v103
    %145 = vst [vmem:[#allocation7 + $0x20] sm:$0xff] %v106
    %146 = vst [vmem:[#allocation7 + $0x28] sm:$0xff] %v109
    %147 = vst [vmem:[#allocation7 + $0x30] sm:$0xff] %v112
    %148 = vst [vmem:[#allocation7 + $0x38] sm:$0xff] %v115
    %149 = vst [vmem:[#allocation7 + $0x40] sm:$0xff] %v118
    %150 = vst [vmem:[#allocation7 + $0x48] sm:$0xff] %v121
    %151 = vst [vmem:[#allocation7 + $0x50] sm:$0xff] %v124
    %152 = vst [vmem:[#allocation7 + $0x58] sm:$0xff] %v127
    %153 = vst [vmem:[#allocation7 + $0x60] sm:$0xff] %v130
    %154 = vst [vmem:[#allocation7 + $0x68] sm:$0xff] %v133
    %155 = vst [vmem:[#allocation7 + $0x70] sm:$0xff] %v136
    %156 = vst [vmem:[#allocation7 + $0x78] sm:$0xff] %v139
    // Predicated region
    $region18: #{tpu_custom_call.1} parent=1 // pred_check
      _
    $region19: #{tpu_custom_call.1} parent=1 // pred_check_branch
      %158 = sbr.rel (0) target = $region21
    $region20: #{tpu_custom_call.1} parent=1 // pred_region
      %160 = vsyncadd [#allocation4], 0
      %s161 = sshll.u32 [#allocation7], 4
      %s162 = int_to_ptr.vmem [resolvable:$true] %s161
      %s163 = sshll.u32 %s2, 4
      %s164 = int_to_ptr.hbm [resolvable:$true] %s163
      %169 = dma.vmem_to_hbm [thread:$0]  %s162, 2048, %s164, [#allocation4], 128, 128, 8
    $region21: #{tpu_custom_call.1} parent=1 // pred_fallthru
      _
    // Predicated region
    $region22: #{tpu_custom_call.1} parent=1 // pred_check
      _
    $region23: #{tpu_custom_call.1} parent=1 // pred_check_branch
      %171 = sbr.rel (0) target = $region25
    $region24: #{tpu_custom_call.1} parent=1 // pred_region
      %173 = dma.done [#allocation4], 2048
    $region25: #{tpu_custom_call.1} parent=1 // pred_fallthru
      _
    %174 = vsyncpa [#allocation3], 1
    %175 = vsyncpa [#allocation6], 1
    %176 = vsyncpa [#allocation4], 1

</llo_original>
